<compile_context>
chip_gen: v6e
topology: v6e:2x2x1
jax: 0.10.0
libtpu: 0.0.40
codegen_flags: <defaults>
</compile_context>

<pallas_src>
import numpy as np
import jax
import jax.numpy as jnp
from jax import lax
from jax.experimental import pallas as pl
from jax.experimental.pallas import tpu as pltpu

# ---------------------------------------------------------------------------
# Config (small shapes consistent with the module)
# ---------------------------------------------------------------------------
TIMESTEPS = 50          # module default is 1000; small here for a quick run
B, C, H, W = 2, 4, 16, 16
D = C * H * W           # 1024
HIDDEN = 32             # hidden width of the synthetic net (no padding)


def beta_schedule(timesteps):
    return jnp.linspace(0.0001, 0.02, timesteps, dtype=jnp.float32)


# ---------------------------------------------------------------------------
# Pallas kernel: noising + timestep-embedding gather + MLP net + MSE reduction
# ---------------------------------------------------------------------------
def diffusion_loss_kernel(t_ref,                       # SMEM (B,)  i32  (scalar prefetch)
                          x_ref, noise_ref,            # VMEM (B, D) f32
                          sab_ref, sbm_ref,            # SMEM (T,)  f32 sqrt tables
                          emb_ref,                     # VMEM (T, HIDDEN) f32
                          w1t_ref, b1_ref, w2_ref, b2_ref,
                          loss_ref,                    # SMEM (1,)  f32
                          noised_s, emb_s):            # VMEM scratch
    bsz = x_ref.shape[0]

    # Per-batch noising + t_emb row gather, fully in-kernel.  Timestep indices
    # and the sqrt(alpha_bar) tables are scalar reads from SMEM; the embedding
    # row is a dynamic-row load from the small VMEM table.
    for b in range(bsz):                               # B=2, static unroll
        t_b = t_ref[b]
        sa = sab_ref[t_b]                              # sqrt(alpha_bar[t_b])
        sb = sbm_ref[t_b]                              # sqrt(1 - alpha_bar[t_b])
        noised_s[pl.ds(b, 1), :] = (sa * x_ref[pl.ds(b, 1), :]
                                    + sb * noise_ref[pl.ds(b, 1), :])
        emb_s[pl.ds(b, 1), :] = emb_ref[pl.ds(t_b, 1), :]

    # net(noised, timestep): Linear -> (+ bias + timestep embedding) -> ReLU -> Linear
    # w1 is stored transposed (HIDDEN, D): lane-dense rhs with no zero-pad HBM
    # penalty; contract over the shared last dim D.
    h = lax.dot_general(noised_s[...], w1t_ref[...],
                        dimension_numbers=(((1,), (1,)), ((), ())),
                        preferred_element_type=jnp.float32)        # (B, HIDDEN)
    h = jnp.maximum(h + b1_ref[...] + emb_s[...], 0.0)
    pred = jnp.dot(h, w2_ref[...], preferred_element_type=jnp.float32)
    pred = pred + b2_ref[...]                                       # (B, D)

    # F.mse_loss(pred, noise): scalar mean, scaled by a compile-time 1/(B*D).
    diff = pred - noise_ref[...]
    inv_n = 1.0 / float(x_ref.shape[0] * x_ref.shape[1])            # static constant
    loss_ref[0] = jnp.sum(diff * diff) * inv_n


def diffusion_loss_pallas(timestep, x_flat, noise_flat, sqrt_ab, sqrt_1m_ab,
                          emb_tbl, w1t, b1, w2, b2):
    bsz, d = x_flat.shape
    hid = w1t.shape[0]

    def vmem_full(shape):
        return pl.BlockSpec(shape, lambda *_: (0,) * len(shape))

    smem_spec = pl.BlockSpec(memory_space=pltpu.MemorySpace.SMEM)

    operands = (timestep, x_flat, noise_flat, sqrt_ab, sqrt_1m_ab,
                emb_tbl, w1t, b1, w2, b2)
    flops = 2 * bsz * d * hid * 2 + 8 * bsz * d
    bytes_accessed = sum(int(a.size) * a.dtype.itemsize for a in operands) + 4

    grid_spec = pltpu.PrefetchScalarGridSpec(
        num_scalar_prefetch=1,            # timestep -> SMEM before the body runs
        grid=(),                          # single resident block; no pipelining
        in_specs=[
            vmem_full(x_flat.shape),
            vmem_full(noise_flat.shape),
            smem_spec,                    # sqrt(alpha_bar) table
            smem_spec,                    # sqrt(1 - alpha_bar) table
            vmem_full(emb_tbl.shape),
            vmem_full(w1t.shape),
            vmem_full(b1.shape),
            vmem_full(w2.shape),
            vmem_full(b2.shape),
        ],
        out_specs=pl.BlockSpec(memory_space=pltpu.MemorySpace.SMEM),
        scratch_shapes=[
            pltpu.VMEM((bsz, d), jnp.float32),     # noised
            pltpu.VMEM((bsz, hid), jnp.float32),   # gathered t_emb rows
        ],
    )

    return pl.pallas_call(
        diffusion_loss_kernel,
        out_shape=jax.ShapeDtypeStruct((1,), jnp.float32),
        grid_spec=grid_spec,
        compiler_params=pltpu.CompilerParams(
            # ~0.5 MiB resident (unpadded weights 256 KiB + activations/tables)
            # with headroom; far below even v7x's 64 MiB physical VMEM.
            vmem_limit_bytes=4 << 20,
        ),
        cost_estimate=pl.CostEstimate(
            flops=flops, transcendentals=0, bytes_accessed=bytes_accessed),
    )(*operands)


# ---------------------------------------------------------------------------
# Parameter / buffer setup (deterministic, in-script)
# ---------------------------------------------------------------------------
def make_params():
    beta = beta_schedule(TIMESTEPS)                        # (T,)
    alpha = 1.0 - beta                                     # (T,)
    alpha_bar = jnp.cumprod(alpha)                         # (T,)

    kp = jax.random.PRNGKey(42)
    k1, k2, k3 = jax.random.split(kp, 3)
    w1 = jax.random.normal(k1, (D, HIDDEN), jnp.float32) * (1.0 / np.sqrt(D))
    b1 = jnp.zeros((1, HIDDEN), jnp.float32)
    w2 = jax.random.normal(k2, (HIDDEN, D), jnp.float32) * (1.0 / np.sqrt(HIDDEN))
    b2 = jnp.zeros((1, D), jnp.float32)
    t_emb = jax.random.normal(k3, (TIMESTEPS, HIDDEN), jnp.float32) * 0.02

    # Kernel-side layouts: w1 transposed (lane-dense rhs, no zero-pad traffic);
    # sqrt tables precomputed once (constant buffers; sqrt is exact, so
    # gather(sqrt(ab), t) == sqrt(gather(ab, t)) bitwise).
    w1t = jnp.transpose(w1)                                # (HIDDEN, D)
    sqrt_ab = jnp.sqrt(alpha_bar).astype(jnp.float32)      # (T,)
    sqrt_1m_ab = jnp.sqrt(1.0 - alpha_bar).astype(jnp.float32)

    return dict(beta=beta, alpha=alpha, alpha_bar=alpha_bar,
                w1=w1, b1=b1, w2=w2, b2=b2, t_emb=t_emb,
                w1t=w1t, sqrt_ab=sqrt_ab, sqrt_1m_ab=sqrt_1m_ab)


# ---------------------------------------------------------------------------
# Forward wrapper (mirrors DiffusionWrapper.forward)
# ---------------------------------------------------------------------------
def diffusion_forward(params, x, key):
    b = x.shape[0]
    k_noise, k_t = jax.random.split(key)

    noise = jax.random.normal(k_noise, x.shape, dtype=jnp.float32)
    timestep = jax.random.randint(k_t, (b,), 0, TIMESTEPS)         # i32

    x_flat = x.reshape(b, -1).astype(jnp.float32)
    noise_flat = noise.reshape(b, -1)

    loss = diffusion_loss_pallas(
        timestep, x_flat, noise_flat,
        params["sqrt_ab"], params["sqrt_1m_ab"], params["t_emb"],
        params["w1t"], params["b1"], params["w2"], params["b2"],
    )
    return loss[0]


if __name__ == "__main__":
    params = make_params()

    key = jax.random.PRNGKey(0)
    k_x, k_fwd = jax.random.split(key)
    x = jax.random.normal(k_x, (B, C, H, W), dtype=jnp.float32)   # NCHW

    loss = diffusion_forward(params, x, k_fwd)
    loss = jax.block_until_ready(loss)

    # Pure-JAX reference check (same noise / timestep; logical untransposed weights)
    k_noise, k_t = jax.random.split(k_fwd)
    noise_ref = jax.random.normal(k_noise, x.shape, dtype=jnp.float32)
    t_ref = jax.random.randint(k_t, (B,), 0, TIMESTEPS)
    ab = jnp.take(params["alpha_bar"], t_ref)
    noised = (jnp.sqrt(ab)[:, None, None, None] * x
              + jnp.sqrt(1.0 - ab)[:, None, None, None] * noise_ref)
    h = jnp.maximum(
        noised.reshape(B, -1) @ params["w1"] + params["b1"] + params["t_emb"][t_ref], 0.0)
    pred = h @ params["w2"] + params["b2"]
    loss_ref_val = jnp.mean((pred - noise_ref.reshape(B, -1)) ** 2)

    assert np.allclose(np.asarray(loss), np.asarray(loss_ref_val), rtol=1e-5, atol=1e-5), \
        (loss, loss_ref_val)

    print("KERNEL_OK")
</pallas_src>

<mosaic_0001>
module attributes {stable_mosaic.version = 11 : i64} {
  func.func @diffusion_loss_kernel(%arg0: memref<2xi32, #tpu.memory_space<smem>>, %arg1: memref<2x1024xf32, #tpu.memory_space<vmem>>, %arg2: memref<2x1024xf32, #tpu.memory_space<vmem>>, %arg3: memref<50xf32, #tpu.memory_space<smem>>, %arg4: memref<50xf32, #tpu.memory_space<smem>>, %arg5: memref<50x32xf32, #tpu.memory_space<vmem>>, %arg6: memref<32x1024xf32, #tpu.memory_space<vmem>>, %arg7: memref<1x32xf32, #tpu.memory_space<vmem>>, %arg8: memref<32x1024xf32, #tpu.memory_space<vmem>>, %arg9: memref<1x1024xf32, #tpu.memory_space<vmem>>, %arg10: memref<1xf32, #tpu.memory_space<smem>>, %arg11: memref<2x1024xf32, #tpu.memory_space<vmem>>, %arg12: memref<2x32xf32, #tpu.memory_space<vmem>>) attributes {dimension_semantics = [], scalar_prefetch = 1 : i64, scratch_operands = 2 : i64, tpu.core_type = #tpu.core_type<tc>} {
    %c0 = arith.constant 0 : index
    %0 = memref.load %arg0[%c0] : memref<2xi32, #tpu.memory_space<smem>>
    %1 = arith.index_cast %0 : i32 to index
    %2 = memref.load %arg3[%1] : memref<50xf32, #tpu.memory_space<smem>>
    %3 = arith.index_cast %0 : i32 to index
    %4 = memref.load %arg4[%3] : memref<50xf32, #tpu.memory_space<smem>>
    %c0_0 = arith.constant 0 : index
    %c0_1 = arith.constant 0 : index
    %5 = vector.load %arg1[%c0_0, %c0_1] : memref<2x1024xf32, #tpu.memory_space<vmem>>, vector<1x1024xf32>
    %6 = vector.broadcast %2 : f32 to vector<1x1024xf32>
    %7 = arith.mulf %6, %5 : vector<1x1024xf32>
    %c0_2 = arith.constant 0 : index
    %c0_3 = arith.constant 0 : index
    %8 = vector.load %arg2[%c0_2, %c0_3] : memref<2x1024xf32, #tpu.memory_space<vmem>>, vector<1x1024xf32>
    %9 = vector.broadcast %4 : f32 to vector<1x1024xf32>
    %10 = arith.mulf %9, %8 : vector<1x1024xf32>
    %11 = arith.addf %7, %10 : vector<1x1024xf32>
    %c0_4 = arith.constant 0 : index
    %c0_5 = arith.constant 0 : index
    %12 = vector.load %arg11[%c0_4, %c0_5] : memref<2x1024xf32, #tpu.memory_space<vmem>>, vector<1x1024xf32>
    tpu.vector_store %arg11[%c0_4, %c0_5], %11 {strides = array<i32>} : memref<2x1024xf32, #tpu.memory_space<vmem>>, vector<1x1024xf32>,
    %13 = arith.index_cast %0 : i32 to index
    %c0_6 = arith.constant 0 : index
    %14 = vector.load %arg5[%13, %c0_6] : memref<50x32xf32, #tpu.memory_space<vmem>>, vector<1x32xf32>
    %c0_7 = arith.constant 0 : index
    %c0_8 = arith.constant 0 : index
    %15 = vector.load %arg12[%c0_7, %c0_8] : memref<2x32xf32, #tpu.memory_space<vmem>>, vector<1x32xf32>
    tpu.vector_store %arg12[%c0_7, %c0_8], %14 {strides = array<i32>} : memref<2x32xf32, #tpu.memory_space<vmem>>, vector<1x32xf32>,
    %c1 = arith.constant 1 : index
    %16 = memref.load %arg0[%c1] : memref<2xi32, #tpu.memory_space<smem>>
    %17 = arith.index_cast %16 : i32 to index
    %18 = memref.load %arg3[%17] : memref<50xf32, #tpu.memory_space<smem>>
    %19 = arith.index_cast %16 : i32 to index
    %20 = memref.load %arg4[%19] : memref<50xf32, #tpu.memory_space<smem>>
    %c1_9 = arith.constant 1 : index
    %c0_10 = arith.constant 0 : index
    %21 = vector.load %arg1[%c1_9, %c0_10] : memref<2x1024xf32, #tpu.memory_space<vmem>>, vector<1x1024xf32>
    %22 = vector.broadcast %18 : f32 to vector<1x1024xf32>
    %23 = arith.mulf %22, %21 : vector<1x1024xf32>
    %c1_11 = arith.constant 1 : index
    %c0_12 = arith.constant 0 : index
    %24 = vector.load %arg2[%c1_11, %c0_12] : memref<2x1024xf32, #tpu.memory_space<vmem>>, vector<1x1024xf32>
    %25 = vector.broadcast %20 : f32 to vector<1x1024xf32>
    %26 = arith.mulf %25, %24 : vector<1x1024xf32>
    %27 = arith.addf %23, %26 : vector<1x1024xf32>
    %c1_13 = arith.constant 1 : index
    %c0_14 = arith.constant 0 : index
    %28 = vector.load %arg11[%c1_13, %c0_14] : memref<2x1024xf32, #tpu.memory_space<vmem>>, vector<1x1024xf32>
    tpu.vector_store %arg11[%c1_13, %c0_14], %27 {strides = array<i32>} : memref<2x1024xf32, #tpu.memory_space<vmem>>, vector<1x1024xf32>,
    %29 = arith.index_cast %16 : i32 to index
    %c0_15 = arith.constant 0 : index
    %30 = vector.load %arg5[%29, %c0_15] : memref<50x32xf32, #tpu.memory_space<vmem>>, vector<1x32xf32>
    %c1_16 = arith.constant 1 : index
    %c0_17 = arith.constant 0 : index
    %31 = vector.load %arg12[%c1_16, %c0_17] : memref<2x32xf32, #tpu.memory_space<vmem>>, vector<1x32xf32>
    tpu.vector_store %arg12[%c1_16, %c0_17], %30 {strides = array<i32>} : memref<2x32xf32, #tpu.memory_space<vmem>>, vector<1x32xf32>,
    %c0_18 = arith.constant 0 : index
    %c0_19 = arith.constant 0 : index
    %32 = vector.load %arg11[%c0_18, %c0_19] : memref<2x1024xf32, #tpu.memory_space<vmem>>, vector<2x1024xf32>
    %c0_20 = arith.constant 0 : index
    %c0_21 = arith.constant 0 : index
    %33 = vector.load %arg6[%c0_20, %c0_21] : memref<32x1024xf32, #tpu.memory_space<vmem>>, vector<32x1024xf32>
    %cst = arith.constant dense<0.000000e+00> : vector<2x32xf32>
    %34 = tpu.matmul %32, %33, %cst {dimension_numbers = #tpu.dot_dimension_numbers<[1], [1], [0], [0], [0, 0, 1, 0], [], []>} : vector<2x1024xf32>, vector<32x1024xf32>, vector<2x32xf32> -> vector<2x32xf32>
    %c0_22 = arith.constant 0 : index
    %c0_23 = arith.constant 0 : index
    %35 = vector.load %arg7[%c0_22, %c0_23] : memref<1x32xf32, #tpu.memory_space<vmem>>, vector<1x32xf32>
    %36 = vector.broadcast %35 : vector<1x32xf32> to vector<2x32xf32>
    %37 = arith.addf %34, %36 : vector<2x32xf32>
    %c0_24 = arith.constant 0 : index
    %c0_25 = arith.constant 0 : index
    %38 = vector.load %arg12[%c0_24, %c0_25] : memref<2x32xf32, #tpu.memory_space<vmem>>, vector<2x32xf32>
    %39 = arith.addf %37, %38 : vector<2x32xf32>
    %cst_26 = arith.constant 0.000000e+00 : f32
    %40 = vector.broadcast %cst_26 : f32 to vector<2x32xf32>
    %41 = arith.maximumf %39, %40 : vector<2x32xf32>
    %c0_27 = arith.constant 0 : index
    %c0_28 = arith.constant 0 : index
    %42 = vector.load %arg8[%c0_27, %c0_28] : memref<32x1024xf32, #tpu.memory_space<vmem>>, vector<32x1024xf32>
    %cst_29 = arith.constant dense<0.000000e+00> : vector<2x1024xf32>
    %43 = tpu.matmul %41, %42, %cst_29 {dimension_numbers = #tpu.dot_dimension_numbers<[1], [0], [0], [1], [0, 0, 1, 1], [], []>} : vector<2x32xf32>, vector<32x1024xf32>, vector<2x1024xf32> -> vector<2x1024xf32>
    %c0_30 = arith.constant 0 : index
    %c0_31 = arith.constant 0 : index
    %44 = vector.load %arg9[%c0_30, %c0_31] : memref<1x1024xf32, #tpu.memory_space<vmem>>, vector<1x1024xf32>
    %45 = vector.broadcast %44 : vector<1x1024xf32> to vector<2x1024xf32>
    %46 = arith.addf %43, %45 : vector<2x1024xf32>
    %c0_32 = arith.constant 0 : index
    %c0_33 = arith.constant 0 : index
    %47 = vector.load %arg2[%c0_32, %c0_33] : memref<2x1024xf32, #tpu.memory_space<vmem>>, vector<2x1024xf32>
    %48 = arith.subf %46, %47 : vector<2x1024xf32>
    %49 = arith.mulf %48, %48 : vector<2x1024xf32>
    %50 = vector.shape_cast %49 : vector<2x1024xf32> to vector<1x2x1024xf32>
    %cst_34 = arith.constant dense<0.000000e+00> : vector<1xf32>
    %51 = vector.multi_reduction <add>, %50, %cst_34 [1, 2] : vector<1x2x1024xf32> to vector<1xf32>
    %52 = vector.shape_cast %51 : vector<1xf32> to vector<1x1x1xf32>
    %53 = vector.extract %52[0, 0, 0] : f32 from vector<1x1x1xf32>
    %cst_35 = arith.constant 4.8828125E-4 : f32
    %54 = arith.mulf %53, %cst_35 : f32
    %c0_36 = arith.constant 0 : index
    %55 = memref.load %arg10[%c0_36] : memref<1xf32, #tpu.memory_space<smem>>
    memref.store %54, %arg10[%c0_36] : memref<1xf32, #tpu.memory_space<smem>>
    return
  }
}

</mosaic_0001>

<llo_original>
// kernel: tpu_custom_call.1
$region0: #{tpu_custom_call.1}
  #allocation0 [shape = 'u32[]', space=smem, size = 0x4, offset = 0x4, fixed_abs, tag = 'smem constant byte address 0x4 - core index']
  #allocation1 [shape = 'u32[144,128]{1,0:T(1,128)}', space=vmem, size = 0x12000, scoped, tag = 'internal scratch']
  #allocation2 [shape = 'f32[2,1024]{1,0:T(2,128)}', space=vmem, size = 0x2000, scoped, tag = 'scratch operand']
  #allocation3 [shape = 'f32[2,32]{1,0:T(2,128)}', space=vmem, size = 0x400, scoped, tag = 'scratch operand']
  #allocation4 [shape = 's32[1]{0}', space=sflag, size = 0x4, scoped, tag = 'scoped memory for tpu_custom_call.1']
  #allocation5 [shape = 'u8[512]{0}', space=smem, size = 0x200, scoped, tag = 'prefetched SMEM operand 0']
  %s0 = inlined_call_operand.vmem [shape: s32[2], index: 0, kind: input, shape index: {}]
  %s1 = inlined_call_operand.vmem [shape: f32[2,1024], index: 1, kind: input, shape index: {}]
  %s2 = inlined_call_operand.vmem [shape: f32[2,1024], index: 2, kind: input, shape index: {}]
  %s3 = inlined_call_operand.vmem [shape: f32[50], index: 3, kind: input, shape index: {}]
  %s4 = inlined_call_operand.vmem [shape: f32[50], index: 4, kind: input, shape index: {}]
  %s5 = inlined_call_operand.vmem [shape: f32[50,32], index: 5, kind: input, shape index: {}]
  %s6 = inlined_call_operand.hbm [shape: f32[32,1024], index: 6, kind: input, shape index: {}]
  %s7 = inlined_call_operand.vmem [shape: f32[1,32], index: 7, kind: input, shape index: {}]
  %s8 = inlined_call_operand.hbm [shape: f32[32,1024], index: 8, kind: input, shape index: {}]
  %s9 = inlined_call_operand.vmem [shape: f32[1,1024], index: 9, kind: input, shape index: {}]
  %s10 = inlined_call_operand.hbm [shape: f32[1], index: 10, kind: output, shape index: {}]
  %s11 = sld [smem:[#allocation0]]
  $region62: #{tpu_custom_call.1} parent=0
    _
  %s13 = ssub.s32 1, %s11
  %s14 = scalar_select 0, %s13, %s11
  %s15 = sshll.u32 %s0, 4
  %s16 = int_to_ptr.vmem [resolvable:$true] %s15
  %18 = dma.vmem_to_smem %s16, 16, [#allocation5], [#allocation4]
  %19 = dma.done [#allocation4], 16
  %20 = sfence
  $region1: #{tpu_custom_call.1} parent=0
    #allocation6 [shape = 'u8[512]{0}', space=smem, size = 0x200, scoped, tag = 'input window, operand 3, single buffered']
    #allocation7 [shape = 's32[1]{0}', space=sflag, size = 0x4, scoped, tag = 'scoped memory for tpu_custom_call.1']
    #allocation8 [shape = 's32[1]{0}', space=sflag, size = 0x4, scoped, tag = 'scoped memory for tpu_custom_call.1']
    #allocation9 [shape = 's32[1]{0}', space=sflag, size = 0x4, scoped, tag = 'scoped memory for tpu_custom_call.1']
    #allocation10 [shape = 'u8[512]{0}', space=smem, size = 0x200, scoped, tag = 'input window, operand 4, single buffered']
    #allocation11 [shape = 's32[1]{0}', space=sflag, size = 0x4, scoped, tag = 'scoped memory for tpu_custom_call.1']
    #allocation12 [shape = 'u8[131072]{0}', space=vmem, size = 0x20000, scoped, tag = 'input window, operand 6, single buffered']
    #allocation13 [shape = 'u8[131072]{0}', space=vmem, size = 0x20000, scoped, tag = 'input window, operand 8, single buffered']
    #allocation14 [shape = 's32[1]{0}', space=sflag, size = 0x4, scoped, tag = 'scoped memory for tpu_custom_call.1']
    #allocation15 [shape = 'u8[512]{0}', space=smem, size = 0x200, scoped, tag = 'output window, operand 0, single buffered']
    %21 = vsyncpa [#allocation9], 0
    %22 = vsyncpa [#allocation11], 0
    %23 = vsyncpa [#allocation7], 0
    %24 = vsyncpa [#allocation14], 0
    %25 = vsyncpa [#allocation8], 0
    // Predicated region
    $region2: #{tpu_custom_call.1} parent=1 // pred_check
      _
    $region3: #{tpu_custom_call.1} parent=1 // pred_check_branch
      %27 = sbr.rel (0) target = $region5
    $region4: #{tpu_custom_call.1} parent=1 // pred_region
      _
    $region5: #{tpu_custom_call.1} parent=1 // pred_fallthru
      _
    // Predicated region
    $region6: #{tpu_custom_call.1} parent=1 // pred_check
      _
    $region7: #{tpu_custom_call.1} parent=1 // pred_check_branch
      %29 = sbr.rel (0) target = $region9
    $region8: #{tpu_custom_call.1} parent=1 // pred_region
      _
    $region9: #{tpu_custom_call.1} parent=1 // pred_fallthru
      _
    // Predicated region
    $region10: #{tpu_custom_call.1} parent=1 // pred_check
      _
    $region11: #{tpu_custom_call.1} parent=1 // pred_check_branch
      %31 = sbr.rel (0) target = $region13
    $region12: #{tpu_custom_call.1} parent=1 // pred_region
      %s33 = ssub.s32 16, 16
      %34 = vsyncadd [#allocation9], %s33
      %s36 = sshll.u32 %s3, 4
      %s37 = int_to_ptr.vmem [resolvable:$true] %s36
      %39 = dma.vmem_to_smem %s37, 16, [#allocation6], [#allocation9]
    $region13: #{tpu_custom_call.1} parent=1 // pred_fallthru
      _
    // Predicated region
    $region14: #{tpu_custom_call.1} parent=1 // pred_check
      _
    $region15: #{tpu_custom_call.1} parent=1 // pred_check_branch
      %41 = sbr.rel (0) target = $region17
    $region16: #{tpu_custom_call.1} parent=1 // pred_region
      %s43 = ssub.s32 16, 16
      %44 = vsyncadd [#allocation11], %s43
      %s46 = sshll.u32 %s4, 4
      %s47 = int_to_ptr.vmem [resolvable:$true] %s46
      %49 = dma.vmem_to_smem %s47, 16, [#allocation10], [#allocation11]
    $region17: #{tpu_custom_call.1} parent=1 // pred_fallthru
      _
    // Predicated region
    $region18: #{tpu_custom_call.1} parent=1 // pred_check
      _
    $region19: #{tpu_custom_call.1} parent=1 // pred_check_branch
      %51 = sbr.rel (0) target = $region21
    $region20: #{tpu_custom_call.1} parent=1 // pred_region
      _
    $region21: #{tpu_custom_call.1} parent=1 // pred_fallthru
      _
    // Predicated region
    $region22: #{tpu_custom_call.1} parent=1 // pred_check
      _
    $region23: #{tpu_custom_call.1} parent=1 // pred_check_branch
      %53 = sbr.rel (0) target = $region25
    $region24: #{tpu_custom_call.1} parent=1 // pred_region
      %s55 = ssub.s32 4096, 4096
      %56 = vsyncadd [#allocation7], %s55
      %s57 = sshll.u32 [#allocation12], 4
      %s58 = int_to_ptr.vmem [resolvable:$true] %s57
      %63 = dma.hbm_to_vmem [thread:$0]  %s6, 4096, %s58, [#allocation7], 1024, 1024, 64
    $region25: #{tpu_custom_call.1} parent=1 // pred_fallthru
      _
    // Predicated region
    $region26: #{tpu_custom_call.1} parent=1 // pred_check
      _
    $region27: #{tpu_custom_call.1} parent=1 // pred_check_branch
      %65 = sbr.rel (0) target = $region29
    $region28: #{tpu_custom_call.1} parent=1 // pred_region
      _
    $region29: #{tpu_custom_call.1} parent=1 // pred_fallthru
      _
    // Predicated region
    $region30: #{tpu_custom_call.1} parent=1 // pred_check
      _
    $region31: #{tpu_custom_call.1} parent=1 // pred_check_branch
      %67 = sbr.rel (0) target = $region33
    $region32: #{tpu_custom_call.1} parent=1 // pred_region
      %s69 = ssub.s32 4096, 4096
      %70 = vsyncadd [#allocation14], %s69
      %s71 = sshll.u32 [#allocation13], 4
      %s72 = int_to_ptr.vmem [resolvable:$true] %s71
      %77 = dma.hbm_to_vmem [thread:$0]  %s8, 4096, %s72, [#allocation14], 1024, 1024, 64
    $region33: #{tpu_custom_call.1} parent=1 // pred_fallthru
      _
    // Predicated region
    $region34: #{tpu_custom_call.1} parent=1 // pred_check
      _
    $region35: #{tpu_custom_call.1} parent=1 // pred_check_branch
      %79 = sbr.rel (0) target = $region37
    $region36: #{tpu_custom_call.1} parent=1 // pred_region
      _
    $region37: #{tpu_custom_call.1} parent=1 // pred_fallthru
      _
    // Predicated region
    $region38: #{tpu_custom_call.1} parent=1 // pred_check
      _
    $region39: #{tpu_custom_call.1} parent=1 // pred_check_branch
      %81 = sbr.rel (0) target = $region41
    $region40: #{tpu_custom_call.1} parent=1 // pred_region
      %82 = dma.done [#allocation9], 16
    $region41: #{tpu_custom_call.1} parent=1 // pred_fallthru
      _
    // Predicated region
    $region42: #{tpu_custom_call.1} parent=1 // pred_check
      _
    $region43: #{tpu_custom_call.1} parent=1 // pred_check_branch
      %84 = sbr.rel (0) target = $region45
    $region44: #{tpu_custom_call.1} parent=1 // pred_region
      %85 = dma.done [#allocation11], 16
    $region45: #{tpu_custom_call.1} parent=1 // pred_fallthru
      _
    // Predicated region
    $region46: #{tpu_custom_call.1} parent=1 // pred_check
      _
    $region47: #{tpu_custom_call.1} parent=1 // pred_check_branch
      %87 = sbr.rel (0) target = $region49
    $region48: #{tpu_custom_call.1} parent=1 // pred_region
      %88 = dma.done [#allocation7], 4096
    $region49: #{tpu_custom_call.1} parent=1 // pred_fallthru
      _
    // Predicated region
    $region50: #{tpu_custom_call.1} parent=1 // pred_check
      _
    $region51: #{tpu_custom_call.1} parent=1 // pred_check_branch
      %90 = sbr.rel (0) target = $region53
    $region52: #{tpu_custom_call.1} parent=1 // pred_region
      %91 = dma.done [#allocation14], 4096
    $region53: #{tpu_custom_call.1} parent=1 // pred_fallthru
      _
    %92 = sfence
    %s93 = sld [smem:[#allocation5]]
    %s94 = sld [smem:[#allocation6 + %s93]]
    %s95 = sld [smem:[#allocation10 + %s93]]
    %v96 = vld [vmem:[%s1] ss:$2 sm:$0xff]
    %v97 = vstv %s94
    %v98 = vmul.f32 %v97, %v96
    %v99 = vld [vmem:[%s2] ss:$2 sm:$0xff]
    %v100 = vstv %s95
    %v101 = vmul.f32 %v100, %v99
    %v102 = vadd.f32 %v98, %v101
    %103 = vst [vmem:[#allocation2] ss:$2 sm:$0xff] %v102
    %s104 = scalar_lea.vmem %s5, %s93
    %v105 = vld [vmem:[%s104] sm:$0x1]
    %vm106 = vcmask 253952
    %107 = vst.msk [vmem:[#allocation3] sm:$0x1] %vm106, %v105
    %s108 = sld [smem:[#allocation5 + $0x1]]
    %s109 = sld [smem:[#allocation6 + %s108]]
    %s110 = sld [smem:[#allocation10 + %s108]]
    %s111 = scalar_lea.vmem %s1, 1
    %v112 = vld [vmem:[%s111] ss:$2 sm:$0xff]
    %v113 = vstv %s109
    %v114 = vmul.f32 %v113, %v112
    %s115 = scalar_lea.vmem %s2, 1
    %v116 = vld [vmem:[%s115] ss:$2 sm:$0xff]
    %v117 = vstv %s110
    %v118 = vmul.f32 %v117, %v116
    %v119 = vadd.f32 %v114, %v118
    %s120 = scalar_lea.vmem [#allocation2], 1
    %121 = vst [vmem:[%s120] ss:$2 sm:$0xff] %v119
    %s122 = scalar_lea.vmem %s5, %s108
    %v123 = vld [vmem:[%s122] sm:$0x1]
    %124 = vst.msk [vmem:[#allocation3 + $0x1] sm:$0x1] %vm106, %v123
    %v125 = vld [vmem:[#allocation2] sm:$0xff]
    %v126 = vld [vmem:[#allocation2 + $0x8] sm:$0xff]
    %v127 = vld [vmem:[#allocation12] sm:$0xff]
    %v128 = vld [vmem:[#allocation12 + $0x8] sm:$0xff]
    %v129 = vld [vmem:[#allocation12 + $0x10] sm:$0xff]
    %v130 = vld [vmem:[#allocation12 + $0x18] sm:$0xff]
    %v131 = vld [vmem:[#allocation12 + $0x20] sm:$0xff]
    %v132 = vld [vmem:[#allocation12 + $0x28] sm:$0xff]
    %v133 = vld [vmem:[#allocation12 + $0x30] sm:$0xff]
    %v134 = vld [vmem:[#allocation12 + $0x38] sm:$0xff]
    %v135 = vld [vmem:[#allocation12 + $0x40] sm:$0xff]
    %v136 = vld [vmem:[#allocation12 + $0x48] sm:$0xff]
    %v137 = vld [vmem:[#allocation12 + $0x50] sm:$0xff]
    %v138 = vld [vmem:[#allocation12 + $0x58] sm:$0xff]
    %v139 = vld [vmem:[#allocation12 + $0x60] sm:$0xff]
    %v140 = vld [vmem:[#allocation12 + $0x68] sm:$0xff]
    %v141 = vld [vmem:[#allocation12 + $0x70] sm:$0xff]
    %v142 = vld [vmem:[#allocation12 + $0x78] sm:$0xff]
    %v143 = vld [vmem:[#allocation12 + $0x80] sm:$0xff]
    %v144 = vld [vmem:[#allocation12 + $0x88] sm:$0xff]
    %v145 = vld [vmem:[#allocation12 + $0x90] sm:$0xff]
    %v146 = vld [vmem:[#allocation12 + $0x98] sm:$0xff]
    %v147 = vld [vmem:[#allocation12 + $0xa0] sm:$0xff]
    %v148 = vld [vmem:[#allocation12 + $0xa8] sm:$0xff]
    %v149 = vld [vmem:[#allocation12 + $0xb0] sm:$0xff]
    %v150 = vld [vmem:[#allocation12 + $0xb8] sm:$0xff]
    %v151 = vld [vmem:[#allocation12 + $0xc0] sm:$0xff]
    %v152 = vld [vmem:[#allocation12 + $0xc8] sm:$0xff]
    %v153 = vld [vmem:[#allocation12 + $0xd0] sm:$0xff]
    %v154 = vld [vmem:[#allocation12 + $0xd8] sm:$0xff]
    %v155 = vld [vmem:[#allocation12 + $0xe0] sm:$0xff]
    %v156 = vld [vmem:[#allocation12 + $0xe8] sm:$0xff]
    %v157 = vld [vmem:[#allocation12 + $0xf0] sm:$0xff]
    %v158 = vld [vmem:[#allocation12 + $0xf8] sm:$0xff]
    %v159 = vld [vmem:[%s7] sm:$0x1]
    %v161 = vlaneseq
    %v162 = vshrl.u32 %v161, 7
    %v163 = vsub.s32 0, %v162
    %v164 = vrot.slane %v159, %v163
    %v168 = vcombine.high %v125, %v125
    %v170 = vunpack.c.l.s4 1983009808
    %v171 = vunpack.c.0.s8 %v170
    %v172 = vlaneseq
    %v173 = vshrl.u32 %v172, 7
    %v174 = vsub.s32 %v171, %v173
    %v175 = vrot.slane %v125, %v174
    %v177 = vunpack.c.l.s4 1983009808
    %v178 = vunpack.c.0.s8 %v177
    %v179 = vlaneseq
    %v180 = vshrl.u32 %v179, 7
    %v181 = vsub.s32 %v178, %v180
    %v182 = vrot.slane %v168, %v181
    %v183 = vcombine.high %v175, %v175
    %v184 = vcombine.high %v182, %v182
    %v185 = vcombine.high %v126, %v126
    %v187 = vunpack.c.l.s4 1983009808
    %v188 = vunpack.c.0.s8 %v187
    %v189 = vlaneseq
    %v190 = vshrl.u32 %v189, 7
    %v191 = vsub.s32 %v188, %v190
    %v192 = vrot.slane %v126, %v191
    %v194 = vunpack.c.l.s4 1983009808
    %v195 = vunpack.c.0.s8 %v194
    %v196 = vlaneseq
    %v197 = vshrl.u32 %v196, 7
    %v198 = vsub.s32 %v195, %v197
    %v199 = vrot.slane %v185, %v198
    %v200 = vcombine.high %v192, %v192
    %v201 = vcombine.high %v199, %v199
    %210 = vmatprep.subr.mxu0 0.0
    %211 = vmatpush1.xpose.msra.mxu0 0.0
    %212 = vmatprep.subr.mxu0 0.0
    %213 = vmatpush1.xpose.msra.mxu0 0.0
    %214 = vmatprep.subr.mxu0 0.0
    %215 = vmatpush1.xpose.msra.mxu0 0.0
    %216 = vmatprep.subr.mxu0 0.0
    %217 = vmatpush1.xpose.msra.mxu0 0.0
    %218 = vmatprep.subr.mxu0 0.0
    %219 = vmatpush1.xpose.msra.mxu0 0.0
    %220 = vmatprep.subr.mxu0 0.0
    %221 = vmatpush1.xpose.msra.mxu0 0.0
    %222 = vmatprep.subr.mxu0 0.0
    %223 = vmatpush1.xpose.msra.mxu0 0.0
    %224 = vmatprep.subr.mxu0 0.0
    %225 = vmatpush1.xpose.msra.mxu0 0.0
    %226 = vmatprep.subr.mxu0 0.0
    %227 = vmatpush1.xpose.msra.mxu0 0.0
    %228 = vmatprep.subr.mxu0 0.0
    %229 = vmatpush1.xpose.msra.mxu0 0.0
    %230 = vmatprep.subr.mxu0 0.0
    %231 = vmatpush1.xpose.msra.mxu0 0.0
    %232 = vmatprep.subr.mxu0 0.0
    %233 = vmatpush1.xpose.msra.mxu0 0.0
    %234 = vmatprep.subr.mxu0 %v152
    %235 = vmatpush1.xpose.msra.mxu0 %v151
    %236 = vmatprep.subr.mxu0 %v144
    %237 = vmatpush1.xpose.msra.mxu0 %v143
    %238 = vmatprep.subr.mxu0 %v136
    %239 = vmatpush1.xpose.msra.mxu0 %v135
    %240 = vmatprep.subr.mxu0 %v128
    %241 = vmatpush1.xpose.msra.mxu0 %v127
    %242 = vmatprep.subr.mxu0 0.0
    %243 = vmatpush2.xpose.msra.mxu0 0.0
    %244 = vmatprep.subr.mxu0 0.0
    %245 = vmatpush2.xpose.msra.mxu0 0.0
    %246 = vmatprep.subr.mxu0 0.0
    %247 = vmatpush2.xpose.msra.mxu0 0.0
    %248 = vmatprep.subr.mxu0 0.0
    %249 = vmatpush2.xpose.msra.mxu0 0.0
    %250 = vmatprep.subr.mxu0 0.0
    %251 = vmatpush2.xpose.msra.mxu0 0.0
    %252 = vmatprep.subr.mxu0 0.0
    %253 = vmatpush2.xpose.msra.mxu0 0.0
    %254 = vmatprep.subr.mxu0 0.0
    %255 = vmatpush2.xpose.msra.mxu0 0.0
    %256 = vmatprep.subr.mxu0 0.0
    %257 = vmatpush2.xpose.msra.mxu0 0.0
    %258 = vmatprep.subr.mxu0 0.0
    %259 = vmatpush2.xpose.msra.mxu0 0.0
    %260 = vmatprep.subr.mxu0 0.0
    %261 = vmatpush2.xpose.msra.mxu0 0.0
    %262 = vmatprep.subr.mxu0 0.0
    %263 = vmatpush2.xpose.msra.mxu0 0.0
    %264 = vmatprep.subr.mxu0 0.0
    %265 = vmatpush2.xpose.msra.mxu0 0.0
    %266 = vmatprep.subr.mxu0 0.0
    %267 = vmatpush2.xpose.msra.mxu0 0.0
    %268 = vmatprep.subr.mxu0 0.0
    %269 = vmatpush2.xpose.msra.mxu0 0.0
    %270 = vmatprep.subr.mxu0 0.0
    %271 = vmatpush2.xpose.msra.mxu0 0.0
    %272 = vmatprep.subr.mxu0 0.0
    %273 = vmatpush2.xpose.msra.mxu0 0.0
    %274 = vmatprep.mubr.f32.mxu0 %v183
    %275 = vmatmul.mubr.f32.gmra.mxu0 %v175
    %v276 = vpop.f32.mrf.mxu0
    %v277 = vadd.f32 %v164, %v276
    %v278 = vpop.f32.mrf.mxu0
    %279 = vdwg.mxu0
    %280 = vmatprep.subr.mxu0 0.0
    %281 = vmatpush1.xpose.msra.mxu0 0.0
    %282 = vmatprep.subr.mxu0 0.0
    %283 = vmatpush1.xpose.msra.mxu0 0.0
    %284 = vmatprep.subr.mxu0 0.0
    %285 = vmatpush1.xpose.msra.mxu0 0.0
    %286 = vmatprep.subr.mxu0 0.0
    %287 = vmatpush1.xpose.msra.mxu0 0.0
    %288 = vmatprep.subr.mxu0 0.0
    %289 = vmatpush1.xpose.msra.mxu0 0.0
    %290 = vmatprep.subr.mxu0 0.0
    %291 = vmatpush1.xpose.msra.mxu0 0.0
    %292 = vmatprep.subr.mxu0 0.0
    %293 = vmatpush1.xpose.msra.mxu0 0.0
    %294 = vmatprep.subr.mxu0 0.0
    %295 = vmatpush1.xpose.msra.mxu0 0.0
    %296 = vmatprep.subr.mxu0 0.0
    %297 = vmatpush1.xpose.msra.mxu0 0.0
    %298 = vmatprep.subr.mxu0 0.0
    %299 = vmatpush1.xpose.msra.mxu0 0.0
    %300 = vmatprep.subr.mxu0 0.0
    %301 = vmatpush1.xpose.msra.mxu0 0.0
    %302 = vmatprep.subr.mxu0 0.0
    %303 = vmatpush1.xpose.msra.mxu0 0.0
    %304 = vmatprep.subr.mxu0 %v154
    %305 = vmatpush1.xpose.msra.mxu0 %v153
    %306 = vmatprep.subr.mxu0 %v146
    %307 = vmatpush1.xpose.msra.mxu0 %v145
    %308 = vmatprep.subr.mxu0 %v138
    %309 = vmatpush1.xpose.msra.mxu0 %v137
    %310 = vmatprep.subr.mxu0 %v130
    %311 = vmatpush1.xpose.msra.mxu0 %v129
    %312 = vmatprep.subr.mxu0 0.0
    %313 = vmatpush2.xpose.msra.mxu0 0.0
    %314 = vmatprep.subr.mxu0 0.0
    %315 = vmatpush2.xpose.msra.mxu0 0.0
    %316 = vmatprep.subr.mxu0 0.0
    %317 = vmatpush2.xpose.msra.mxu0 0.0
    %318 = vmatprep.subr.mxu0 0.0
    %319 = vmatpush2.xpose.msra.mxu0 0.0
    %320 = vmatprep.subr.mxu0 0.0
    %321 = vmatpush2.xpose.msra.mxu0 0.0
    %322 = vmatprep.subr.mxu0 0.0
    %323 = vmatpush2.xpose.msra.mxu0 0.0
    %324 = vmatprep.subr.mxu0 0.0
    %325 = vmatpush2.xpose.msra.mxu0 0.0
    %326 = vmatprep.subr.mxu0 0.0
    %327 = vmatpush2.xpose.msra.mxu0 0.0
    %328 = vmatprep.subr.mxu0 0.0
    %329 = vmatpush2.xpose.msra.mxu0 0.0
    %330 = vmatprep.subr.mxu0 0.0
    %331 = vmatpush2.xpose.msra.mxu0 0.0
    %332 = vmatprep.subr.mxu0 0.0
    %333 = vmatpush2.xpose.msra.mxu0 0.0
    %334 = vmatprep.subr.mxu0 0.0
    %335 = vmatpush2.xpose.msra.mxu0 0.0
    %336 = vmatprep.subr.mxu0 0.0
    %337 = vmatpush2.xpose.msra.mxu0 0.0
    %338 = vmatprep.subr.mxu0 0.0
    %339 = vmatpush2.xpose.msra.mxu0 0.0
    %340 = vmatprep.subr.mxu0 0.0
    %341 = vmatpush2.xpose.msra.mxu0 0.0
    %342 = vmatprep.subr.mxu0 0.0
    %343 = vmatpush2.xpose.msra.mxu0 0.0
    %344 = vmatprep.mubr.f32.mxu0 %v184
    %345 = vmatmul.mubr.f32.gmra.mxu0 %v182
    %v346 = vpop.f32.mrf.mxu0
    %v347 = vadd.f32 %v277, %v346
    %v348 = vpop.f32.mrf.mxu0
    %349 = vdwg.mxu0
    %350 = vmatprep.subr.mxu0 0.0
    %351 = vmatpush1.xpose.msra.mxu0 0.0
    %352 = vmatprep.subr.mxu0 0.0
    %353 = vmatpush1.xpose.msra.mxu0 0.0
    %354 = vmatprep.subr.mxu0 0.0
    %355 = vmatpush1.xpose.msra.mxu0 0.0
    %356 = vmatprep.subr.mxu0 0.0
    %357 = vmatpush1.xpose.msra.mxu0 0.0
    %358 = vmatprep.subr.mxu0 0.0
    %359 = vmatpush1.xpose.msra.mxu0 0.0
    %360 = vmatprep.subr.mxu0 0.0
    %361 = vmatpush1.xpose.msra.mxu0 0.0
    %362 = vmatprep.subr.mxu0 0.0
    %363 = vmatpush1.xpose.msra.mxu0 0.0
    %364 = vmatprep.subr.mxu0 0.0
    %365 = vmatpush1.xpose.msra.mxu0 0.0
    %366 = vmatprep.subr.mxu0 0.0
    %367 = vmatpush1.xpose.msra.mxu0 0.0
    %368 = vmatprep.subr.mxu0 0.0
    %369 = vmatpush1.xpose.msra.mxu0 0.0
    %370 = vmatprep.subr.mxu0 0.0
    %371 = vmatpush1.xpose.msra.mxu0 0.0
    %372 = vmatprep.subr.mxu0 0.0
    %373 = vmatpush1.xpose.msra.mxu0 0.0
    %374 = vmatprep.subr.mxu0 %v156
    %375 = vmatpush1.xpose.msra.mxu0 %v155
    %376 = vmatprep.subr.mxu0 %v148
    %377 = vmatpush1.xpose.msra.mxu0 %v147
    %378 = vmatprep.subr.mxu0 %v140
    %379 = vmatpush1.xpose.msra.mxu0 %v139
    %380 = vmatprep.subr.mxu0 %v132
    %381 = vmatpush1.xpose.msra.mxu0 %v131
    %382 = vmatprep.subr.mxu0 0.0
    %383 = vmatpush2.xpose.msra.mxu0 0.0
    %384 = vmatprep.subr.mxu0 0.0
    %385 = vmatpush2.xpose.msra.mxu0 0.0
    %386 = vmatprep.subr.mxu0 0.0
    %387 = vmatpush2.xpose.msra.mxu0 0.0
    %388 = vmatprep.subr.mxu0 0.0
    %389 = vmatpush2.xpose.msra.mxu0 0.0
    %390 = vmatprep.subr.mxu0 0.0
    %391 = vmatpush2.xpose.msra.mxu0 0.0
    %392 = vmatprep.subr.mxu0 0.0
    %393 = vmatpush2.xpose.msra.mxu0 0.0
    %394 = vmatprep.subr.mxu0 0.0
    %395 = vmatpush2.xpose.msra.mxu0 0.0
    %396 = vmatprep.subr.mxu0 0.0
    %397 = vmatpush2.xpose.msra.mxu0 0.0
    %398 = vmatprep.subr.mxu0 0.0
    %399 = vmatpush2.xpose.msra.mxu0 0.0
    %400 = vmatprep.subr.mxu0 0.0
    %401 = vmatpush2.xpose.msra.mxu0 0.0
    %402 = vmatprep.subr.mxu0 0.0
    %403 = vmatpush2.xpose.msra.mxu0 0.0
    %404 = vmatprep.subr.mxu0 0.0
    %405 = vmatpush2.xpose.msra.mxu0 0.0
    %406 = vmatprep.subr.mxu0 0.0
    %407 = vmatpush2.xpose.msra.mxu0 0.0
    %408 = vmatprep.subr.mxu0 0.0
    %409 = vmatpush2.xpose.msra.mxu0 0.0
    %410 = vmatprep.subr.mxu0 0.0
    %411 = vmatpush2.xpose.msra.mxu0 0.0
    %412 = vmatprep.subr.mxu0 0.0
    %413 = vmatpush2.xpose.msra.mxu0 0.0
    %414 = vmatprep.mubr.f32.mxu0 %v200
    %415 = vmatmul.mubr.f32.gmra.mxu0 %v192
    %v416 = vpop.f32.mrf.mxu0
    %v417 = vadd.f32 %v347, %v416
    %v418 = vpop.f32.mrf.mxu0
    %419 = vdwg.mxu0
    %420 = vmatprep.subr.mxu0 0.0
    %421 = vmatpush1.xpose.msra.mxu0 0.0
    %422 = vmatprep.subr.mxu0 0.0
    %423 = vmatpush1.xpose.msra.mxu0 0.0
    %424 = vmatprep.subr.mxu0 0.0
    %425 = vmatpush1.xpose.msra.mxu0 0.0
    %426 = vmatprep.subr.mxu0 0.0
    %427 = vmatpush1.xpose.msra.mxu0 0.0
    %428 = vmatprep.subr.mxu0 0.0
    %429 = vmatpush1.xpose.msra.mxu0 0.0
    %430 = vmatprep.subr.mxu0 0.0
    %431 = vmatpush1.xpose.msra.mxu0 0.0
    %432 = vmatprep.subr.mxu0 0.0
    %433 = vmatpush1.xpose.msra.mxu0 0.0
    %434 = vmatprep.subr.mxu0 0.0
    %435 = vmatpush1.xpose.msra.mxu0 0.0
    %436 = vmatprep.subr.mxu0 0.0
    %437 = vmatpush1.xpose.msra.mxu0 0.0
    %438 = vmatprep.subr.mxu0 0.0
    %439 = vmatpush1.xpose.msra.mxu0 0.0
    %440 = vmatprep.subr.mxu0 0.0
    %441 = vmatpush1.xpose.msra.mxu0 0.0
    %442 = vmatprep.subr.mxu0 0.0
    %443 = vmatpush1.xpose.msra.mxu0 0.0
    %444 = vmatprep.subr.mxu0 %v158
    %445 = vmatpush1.xpose.msra.mxu0 %v157
    %446 = vmatprep.subr.mxu0 %v150
    %447 = vmatpush1.xpose.msra.mxu0 %v149
    %448 = vmatprep.subr.mxu0 %v142
    %449 = vmatpush1.xpose.msra.mxu0 %v141
    %450 = vmatprep.subr.mxu0 %v134
    %451 = vmatpush1.xpose.msra.mxu0 %v133
    %452 = vmatprep.subr.mxu0 0.0
    %453 = vmatpush2.xpose.msra.mxu0 0.0
    %454 = vmatprep.subr.mxu0 0.0
    %455 = vmatpush2.xpose.msra.mxu0 0.0
    %456 = vmatprep.subr.mxu0 0.0
    %457 = vmatpush2.xpose.msra.mxu0 0.0
    %458 = vmatprep.subr.mxu0 0.0
    %459 = vmatpush2.xpose.msra.mxu0 0.0
    %460 = vmatprep.subr.mxu0 0.0
    %461 = vmatpush2.xpose.msra.mxu0 0.0
    %462 = vmatprep.subr.mxu0 0.0
    %463 = vmatpush2.xpose.msra.mxu0 0.0
    %464 = vmatprep.subr.mxu0 0.0
    %465 = vmatpush2.xpose.msra.mxu0 0.0
    %466 = vmatprep.subr.mxu0 0.0
    %467 = vmatpush2.xpose.msra.mxu0 0.0
    %468 = vmatprep.subr.mxu0 0.0
    %469 = vmatpush2.xpose.msra.mxu0 0.0
    %470 = vmatprep.subr.mxu0 0.0
    %471 = vmatpush2.xpose.msra.mxu0 0.0
    %472 = vmatprep.subr.mxu0 0.0
    %473 = vmatpush2.xpose.msra.mxu0 0.0
    %474 = vmatprep.subr.mxu0 0.0
    %475 = vmatpush2.xpose.msra.mxu0 0.0
    %476 = vmatprep.subr.mxu0 0.0
    %477 = vmatpush2.xpose.msra.mxu0 0.0
    %478 = vmatprep.subr.mxu0 0.0
    %479 = vmatpush2.xpose.msra.mxu0 0.0
    %480 = vmatprep.subr.mxu0 0.0
    %481 = vmatpush2.xpose.msra.mxu0 0.0
    %482 = vmatprep.subr.mxu0 0.0
    %483 = vmatpush2.xpose.msra.mxu0 0.0
    %484 = vmatprep.mubr.f32.mxu0 %v201
    %485 = vmatmul.mubr.f32.gmra.mxu0 %v199
    %v486 = vpop.f32.mrf.mxu0
    %v487 = vadd.f32 %v417, %v486
    %v488 = vpop.f32.mrf.mxu0
    %489 = vdwg.mxu0
    %v490 = vld [vmem:[#allocation3] sm:$0x3]
    %v491 = vadd.f32 %v487, %v490
    %v492 = vmax.f32 %v491, 0.0
    %v493 = vld [vmem:[#allocation13] sm:$0xff]
    %v494 = vld [vmem:[#allocation13 + $0x8] sm:$0xff]
    %v495 = vld [vmem:[#allocation13 + $0x10] sm:$0xff]
    %v496 = vld [vmem:[#allocation13 + $0x18] sm:$0xff]
    %v497 = vld [vmem:[#allocation13 + $0x20] sm:$0xff]
    %v498 = vld [vmem:[#allocation13 + $0x28] sm:$0xff]
    %v499 = vld [vmem:[#allocation13 + $0x30] sm:$0xff]
    %v500 = vld [vmem:[#allocation13 + $0x38] sm:$0xff]
    %v501 = vld [vmem:[#allocation13 + $0x40] sm:$0xff]
    %v502 = vld [vmem:[#allocation13 + $0x48] sm:$0xff]
    %v503 = vld [vmem:[#allocation13 + $0x50] sm:$0xff]
    %v504 = vld [vmem:[#allocation13 + $0x58] sm:$0xff]
    %v505 = vld [vmem:[#allocation13 + $0x60] sm:$0xff]
    %v506 = vld [vmem:[#allocation13 + $0x68] sm:$0xff]
    %v507 = vld [vmem:[#allocation13 + $0x70] sm:$0xff]
    %v508 = vld [vmem:[#allocation13 + $0x78] sm:$0xff]
    %v509 = vld [vmem:[#allocation13 + $0x80] sm:$0xff]
    %v510 = vld [vmem:[#allocation13 + $0x88] sm:$0xff]
    %v511 = vld [vmem:[#allocation13 + $0x90] sm:$0xff]
    %v512 = vld [vmem:[#allocation13 + $0x98] sm:$0xff]
    %v513 = vld [vmem:[#allocation13 + $0xa0] sm:$0xff]
    %v514 = vld [vmem:[#allocation13 + $0xa8] sm:$0xff]
    %v515 = vld [vmem:[#allocation13 + $0xb0] sm:$0xff]
    %v516 = vld [vmem:[#allocation13 + $0xb8] sm:$0xff]
    %v517 = vld [vmem:[#allocation13 + $0xc0] sm:$0xff]
    %v518 = vld [vmem:[#allocation13 + $0xc8] sm:$0xff]
    %v519 = vld [vmem:[#allocation13 + $0xd0] sm:$0xff]
    %v520 = vld [vmem:[#allocation13 + $0xd8] sm:$0xff]
    %v521 = vld [vmem:[#allocation13 + $0xe0] sm:$0xff]
    %v522 = vld [vmem:[#allocation13 + $0xe8] sm:$0xff]
    %v523 = vld [vmem:[#allocation13 + $0xf0] sm:$0xff]
    %v524 = vld [vmem:[#allocation13 + $0xf8] sm:$0xff]
    %v525 = vld [vmem:[%s9] sm:$0xff]
    %v527 = vlaneseq
    %v528 = vshrl.u32 %v527, 7
    %v529 = vsub.s32 0, %v528
    %v530 = vrot.slane %v525, %v529
    %v531 = vlaneseq
    %v532 = vshrl.u32 %v531, 7
    %v533 = vsub.s32 1, %v532
    %v534 = vrot.slane %v525, %v533
    %v535 = vlaneseq
    %v536 = vshrl.u32 %v535, 7
    %v537 = vsub.s32 2, %v536
    %v538 = vrot.slane %v525, %v537
    %v539 = vlaneseq
    %v540 = vshrl.u32 %v539, 7
    %v541 = vsub.s32 3, %v540
    %v542 = vrot.slane %v525, %v541
    %v543 = vlaneseq
    %v544 = vshrl.u32 %v543, 7
    %v545 = vsub.s32 4, %v544
    %v546 = vrot.slane %v525, %v545
    %v547 = vlaneseq
    %v548 = vshrl.u32 %v547, 7
    %v549 = vsub.s32 5, %v548
    %v550 = vrot.slane %v525, %v549
    %v551 = vlaneseq
    %v552 = vshrl.u32 %v551, 7
    %v553 = vsub.s32 6, %v552
    %v554 = vrot.slane %v525, %v553
    %v555 = vlaneseq
    %v556 = vshrl.u32 %v555, 7
    %v557 = vsub.s32 7, %v556
    %v558 = vrot.slane %v525, %v557
    %vm567 = vcmask 261120
    %v569 = vsel %vm567, %v492, 0
    %571 = vmatprep.subr.mxu0 0.0
    %572 = vmatpush1.msra.mxu0 0.0
    %573 = vmatprep.subr.mxu0 0.0
    %574 = vmatpush1.msra.mxu0 0.0
    %575 = vmatprep.subr.mxu0 0.0
    %576 = vmatpush1.msra.mxu0 0.0
    %577 = vmatprep.subr.mxu0 0.0
    %578 = vmatpush1.msra.mxu0 0.0
    %579 = vmatprep.subr.mxu0 0.0
    %580 = vmatpush1.msra.mxu0 0.0
    %581 = vmatprep.subr.mxu0 0.0
    %582 = vmatpush1.msra.mxu0 0.0
    %583 = vmatprep.subr.mxu0 0.0
    %584 = vmatpush1.msra.mxu0 0.0
    %585 = vmatprep.subr.mxu0 0.0
    %586 = vmatpush1.msra.mxu0 0.0
    %587 = vmatprep.subr.mxu0 0.0
    %588 = vmatpush1.msra.mxu0 0.0
    %589 = vmatprep.subr.mxu0 0.0
    %590 = vmatpush1.msra.mxu0 0.0
    %591 = vmatprep.subr.mxu0 0.0
    %592 = vmatpush1.msra.mxu0 0.0
    %593 = vmatprep.subr.mxu0 0.0
    %594 = vmatpush1.msra.mxu0 0.0
    %595 = vmatprep.subr.mxu0 %v518
    %596 = vmatpush1.msra.mxu0 %v517
    %597 = vmatprep.subr.mxu0 %v510
    %598 = vmatpush1.msra.mxu0 %v509
    %599 = vmatprep.subr.mxu0 %v502
    %600 = vmatpush1.msra.mxu0 %v501
    %601 = vmatprep.subr.mxu0 %v494
    %602 = vmatpush1.msra.mxu0 %v493
    %603 = vmatprep.subr.mxu0 0.0
    %604 = vmatpush2.msra.mxu0 0.0
    %605 = vmatprep.subr.mxu0 0.0
    %606 = vmatpush2.msra.mxu0 0.0
    %607 = vmatprep.subr.mxu0 0.0
    %608 = vmatpush2.msra.mxu0 0.0
    %609 = vmatprep.subr.mxu0 0.0
    %610 = vmatpush2.msra.mxu0 0.0
    %611 = vmatprep.subr.mxu0 0.0
    %612 = vmatpush2.msra.mxu0 0.0
    %613 = vmatprep.subr.mxu0 0.0
    %614 = vmatpush2.msra.mxu0 0.0
    %615 = vmatprep.subr.mxu0 0.0
    %616 = vmatpush2.msra.mxu0 0.0
    %617 = vmatprep.subr.mxu0 0.0
    %618 = vmatpush2.msra.mxu0 0.0
    %619 = vmatprep.subr.mxu0 0.0
    %620 = vmatpush2.msra.mxu0 0.0
    %621 = vmatprep.subr.mxu0 0.0
    %622 = vmatpush2.msra.mxu0 0.0
    %623 = vmatprep.subr.mxu0 0.0
    %624 = vmatpush2.msra.mxu0 0.0
    %625 = vmatprep.subr.mxu0 0.0
    %626 = vmatpush2.msra.mxu0 0.0
    %627 = vmatprep.subr.mxu0 0.0
    %628 = vmatpush2.msra.mxu0 0.0
    %629 = vmatprep.subr.mxu0 0.0
    %630 = vmatpush2.msra.mxu0 0.0
    %631 = vmatprep.subr.mxu0 0.0
    %632 = vmatpush2.msra.mxu0 0.0
    %633 = vmatprep.subr.mxu0 0.0
    %634 = vmatpush2.msra.mxu0 0.0
    %635 = vmatprep.mubr.f32.mxu0 0.0
    %636 = vmatmul.mubr.f32.gmra.mxu0 %v569
    %v637 = vpop.f32.mrf.mxu0
    %v638 = vadd.f32 %v530, %v637
    %v639 = vpop.f32.mrf.mxu0
    %v640 = vadd.f32 %v534, %v639
    %641 = vdwg.mxu0
    %642 = vmatprep.subr.mxu0 0.0
    %643 = vmatpush1.msra.mxu0 0.0
    %644 = vmatprep.subr.mxu0 0.0
    %645 = vmatpush1.msra.mxu0 0.0
    %646 = vmatprep.subr.mxu0 0.0
    %647 = vmatpush1.msra.mxu0 0.0
    %648 = vmatprep.subr.mxu0 0.0
    %649 = vmatpush1.msra.mxu0 0.0
    %650 = vmatprep.subr.mxu0 0.0
    %651 = vmatpush1.msra.mxu0 0.0
    %652 = vmatprep.subr.mxu0 0.0
    %653 = vmatpush1.msra.mxu0 0.0
    %654 = vmatprep.subr.mxu0 0.0
    %655 = vmatpush1.msra.mxu0 0.0
    %656 = vmatprep.subr.mxu0 0.0
    %657 = vmatpush1.msra.mxu0 0.0
    %658 = vmatprep.subr.mxu0 0.0
    %659 = vmatpush1.msra.mxu0 0.0
    %660 = vmatprep.subr.mxu0 0.0
    %661 = vmatpush1.msra.mxu0 0.0
    %662 = vmatprep.subr.mxu0 0.0
    %663 = vmatpush1.msra.mxu0 0.0
    %664 = vmatprep.subr.mxu0 0.0
    %665 = vmatpush1.msra.mxu0 0.0
    %666 = vmatprep.subr.mxu0 %v520
    %667 = vmatpush1.msra.mxu0 %v519
    %668 = vmatprep.subr.mxu0 %v512
    %669 = vmatpush1.msra.mxu0 %v511
    %670 = vmatprep.subr.mxu0 %v504
    %671 = vmatpush1.msra.mxu0 %v503
    %672 = vmatprep.subr.mxu0 %v496
    %673 = vmatpush1.msra.mxu0 %v495
    %674 = vmatprep.subr.mxu0 0.0
    %675 = vmatpush2.msra.mxu0 0.0
    %676 = vmatprep.subr.mxu0 0.0
    %677 = vmatpush2.msra.mxu0 0.0
    %678 = vmatprep.subr.mxu0 0.0
    %679 = vmatpush2.msra.mxu0 0.0
    %680 = vmatprep.subr.mxu0 0.0
    %681 = vmatpush2.msra.mxu0 0.0
    %682 = vmatprep.subr.mxu0 0.0
    %683 = vmatpush2.msra.mxu0 0.0
    %684 = vmatprep.subr.mxu0 0.0
    %685 = vmatpush2.msra.mxu0 0.0
    %686 = vmatprep.subr.mxu0 0.0
    %687 = vmatpush2.msra.mxu0 0.0
    %688 = vmatprep.subr.mxu0 0.0
    %689 = vmatpush2.msra.mxu0 0.0
    %690 = vmatprep.subr.mxu0 0.0
    %691 = vmatpush2.msra.mxu0 0.0
    %692 = vmatprep.subr.mxu0 0.0
    %693 = vmatpush2.msra.mxu0 0.0
    %694 = vmatprep.subr.mxu0 0.0
    %695 = vmatpush2.msra.mxu0 0.0
    %696 = vmatprep.subr.mxu0 0.0
    %697 = vmatpush2.msra.mxu0 0.0
    %698 = vmatprep.subr.mxu0 0.0
    %699 = vmatpush2.msra.mxu0 0.0
    %700 = vmatprep.subr.mxu0 0.0
    %701 = vmatpush2.msra.mxu0 0.0
    %702 = vmatprep.subr.mxu0 0.0
    %703 = vmatpush2.msra.mxu0 0.0
    %704 = vmatprep.subr.mxu0 0.0
    %705 = vmatpush2.msra.mxu0 0.0
    %706 = vmatprep.mubr.f32.mxu0 0.0
    %707 = vmatmul.mubr.f32.gmra.mxu0 %v569
    %v708 = vpop.f32.mrf.mxu0
    %v709 = vadd.f32 %v538, %v708
    %v710 = vpop.f32.mrf.mxu0
    %v711 = vadd.f32 %v542, %v710
    %712 = vdwg.mxu0
    %713 = vmatprep.subr.mxu0 0.0
    %714 = vmatpush1.msra.mxu0 0.0
    %715 = vmatprep.subr.mxu0 0.0
    %716 = vmatpush1.msra.mxu0 0.0
    %717 = vmatprep.subr.mxu0 0.0
    %718 = vmatpush1.msra.mxu0 0.0
    %719 = vmatprep.subr.mxu0 0.0
    %720 = vmatpush1.msra.mxu0 0.0
    %721 = vmatprep.subr.mxu0 0.0
    %722 = vmatpush1.msra.mxu0 0.0
    %723 = vmatprep.subr.mxu0 0.0
    %724 = vmatpush1.msra.mxu0 0.0
    %725 = vmatprep.subr.mxu0 0.0
    %726 = vmatpush1.msra.mxu0 0.0
    %727 = vmatprep.subr.mxu0 0.0
    %728 = vmatpush1.msra.mxu0 0.0
    %729 = vmatprep.subr.mxu0 0.0
    %730 = vmatpush1.msra.mxu0 0.0
    %731 = vmatprep.subr.mxu0 0.0
    %732 = vmatpush1.msra.mxu0 0.0
    %733 = vmatprep.subr.mxu0 0.0
    %734 = vmatpush1.msra.mxu0 0.0
    %735 = vmatprep.subr.mxu0 0.0
    %736 = vmatpush1.msra.mxu0 0.0
    %737 = vmatprep.subr.mxu0 %v522
    %738 = vmatpush1.msra.mxu0 %v521
    %739 = vmatprep.subr.mxu0 %v514
    %740 = vmatpush1.msra.mxu0 %v513
    %741 = vmatprep.subr.mxu0 %v506
    %742 = vmatpush1.msra.mxu0 %v505
    %743 = vmatprep.subr.mxu0 %v498
    %744 = vmatpush1.msra.mxu0 %v497
    %745 = vmatprep.subr.mxu0 0.0
    %746 = vmatpush2.msra.mxu0 0.0
    %747 = vmatprep.subr.mxu0 0.0
    %748 = vmatpush2.msra.mxu0 0.0
    %749 = vmatprep.subr.mxu0 0.0
    %750 = vmatpush2.msra.mxu0 0.0
    %751 = vmatprep.subr.mxu0 0.0
    %752 = vmatpush2.msra.mxu0 0.0
    %753 = vmatprep.subr.mxu0 0.0
    %754 = vmatpush2.msra.mxu0 0.0
    %755 = vmatprep.subr.mxu0 0.0
    %756 = vmatpush2.msra.mxu0 0.0
    %757 = vmatprep.subr.mxu0 0.0
    %758 = vmatpush2.msra.mxu0 0.0
    %759 = vmatprep.subr.mxu0 0.0
    %760 = vmatpush2.msra.mxu0 0.0
    %761 = vmatprep.subr.mxu0 0.0
    %762 = vmatpush2.msra.mxu0 0.0
    %763 = vmatprep.subr.mxu0 0.0
    %764 = vmatpush2.msra.mxu0 0.0
    %765 = vmatprep.subr.mxu0 0.0
    %766 = vmatpush2.msra.mxu0 0.0
    %767 = vmatprep.subr.mxu0 0.0
    %768 = vmatpush2.msra.mxu0 0.0
    %769 = vmatprep.subr.mxu0 0.0
    %770 = vmatpush2.msra.mxu0 0.0
    %771 = vmatprep.subr.mxu0 0.0
    %772 = vmatpush2.msra.mxu0 0.0
    %773 = vmatprep.subr.mxu0 0.0
    %774 = vmatpush2.msra.mxu0 0.0
    %775 = vmatprep.subr.mxu0 0.0
    %776 = vmatpush2.msra.mxu0 0.0
    %777 = vmatprep.mubr.f32.mxu0 0.0
    %778 = vmatmul.mubr.f32.gmra.mxu0 %v569
    %v779 = vpop.f32.mrf.mxu0
    %v780 = vadd.f32 %v546, %v779
    %v781 = vpop.f32.mrf.mxu0
    %v782 = vadd.f32 %v550, %v781
    %783 = vdwg.mxu0
    %784 = vmatprep.subr.mxu0 0.0
    %785 = vmatpush1.msra.mxu0 0.0
    %786 = vmatprep.subr.mxu0 0.0
    %787 = vmatpush1.msra.mxu0 0.0
    %788 = vmatprep.subr.mxu0 0.0
    %789 = vmatpush1.msra.mxu0 0.0
    %790 = vmatprep.subr.mxu0 0.0
    %791 = vmatpush1.msra.mxu0 0.0
    %792 = vmatprep.subr.mxu0 0.0
    %793 = vmatpush1.msra.mxu0 0.0
    %794 = vmatprep.subr.mxu0 0.0
    %795 = vmatpush1.msra.mxu0 0.0
    %796 = vmatprep.subr.mxu0 0.0
    %797 = vmatpush1.msra.mxu0 0.0
    %798 = vmatprep.subr.mxu0 0.0
    %799 = vmatpush1.msra.mxu0 0.0
    %800 = vmatprep.subr.mxu0 0.0
    %801 = vmatpush1.msra.mxu0 0.0
    %802 = vmatprep.subr.mxu0 0.0
    %803 = vmatpush1.msra.mxu0 0.0
    %804 = vmatprep.subr.mxu0 0.0
    %805 = vmatpush1.msra.mxu0 0.0
    %806 = vmatprep.subr.mxu0 0.0
    %807 = vmatpush1.msra.mxu0 0.0
    %808 = vmatprep.subr.mxu0 %v524
    %809 = vmatpush1.msra.mxu0 %v523
    %810 = vmatprep.subr.mxu0 %v516
    %811 = vmatpush1.msra.mxu0 %v515
    %812 = vmatprep.subr.mxu0 %v508
    %813 = vmatpush1.msra.mxu0 %v507
    %814 = vmatprep.subr.mxu0 %v500
    %815 = vmatpush1.msra.mxu0 %v499
    %816 = vmatprep.subr.mxu0 0.0
    %817 = vmatpush2.msra.mxu0 0.0
    %818 = vmatprep.subr.mxu0 0.0
    %819 = vmatpush2.msra.mxu0 0.0
    %820 = vmatprep.subr.mxu0 0.0
    %821 = vmatpush2.msra.mxu0 0.0
    %822 = vmatprep.subr.mxu0 0.0
    %823 = vmatpush2.msra.mxu0 0.0
    %824 = vmatprep.subr.mxu0 0.0
    %825 = vmatpush2.msra.mxu0 0.0
    %826 = vmatprep.subr.mxu0 0.0
    %827 = vmatpush2.msra.mxu0 0.0
    %828 = vmatprep.subr.mxu0 0.0
    %829 = vmatpush2.msra.mxu0 0.0
    %830 = vmatprep.subr.mxu0 0.0
    %831 = vmatpush2.msra.mxu0 0.0
    %832 = vmatprep.subr.mxu0 0.0
    %833 = vmatpush2.msra.mxu0 0.0
    %834 = vmatprep.subr.mxu0 0.0
    %835 = vmatpush2.msra.mxu0 0.0
    %836 = vmatprep.subr.mxu0 0.0
    %837 = vmatpush2.msra.mxu0 0.0
    %838 = vmatprep.subr.mxu0 0.0
    %839 = vmatpush2.msra.mxu0 0.0
    %840 = vmatprep.subr.mxu0 0.0
    %841 = vmatpush2.msra.mxu0 0.0
    %842 = vmatprep.subr.mxu0 0.0
    %843 = vmatpush2.msra.mxu0 0.0
    %844 = vmatprep.subr.mxu0 0.0
    %845 = vmatpush2.msra.mxu0 0.0
    %846 = vmatprep.subr.mxu0 0.0
    %847 = vmatpush2.msra.mxu0 0.0
    %848 = vmatprep.mubr.f32.mxu0 0.0
    %849 = vmatmul.mubr.f32.gmra.mxu0 %v569
    %v850 = vpop.f32.mrf.mxu0
    %v851 = vadd.f32 %v554, %v850
    %v852 = vpop.f32.mrf.mxu0
    %v853 = vadd.f32 %v558, %v852
    %854 = vdwg.mxu0
    %v855 = vld [vmem:[%s2] sm:$0xff]
    %v856 = vld [vmem:[%s2 + $0x8] sm:$0xff]
    %v859 = vcombine.high %v855, %v855
    %v861 = vunpack.c.l.s4 1983009808
    %v862 = vunpack.c.0.s8 %v861
    %v863 = vlaneseq
    %v864 = vshrl.u32 %v863, 7
    %v865 = vsub.s32 %v862, %v864
    %v866 = vrot.slane %v855, %v865
    %v868 = vunpack.c.l.s4 1983009808
    %v869 = vunpack.c.0.s8 %v868
    %v870 = vlaneseq
    %v871 = vshrl.u32 %v870, 7
    %v872 = vsub.s32 %v869, %v871
    %v873 = vrot.slane %v859, %v872
    %v874 = vcombine.high %v866, %v866
    %v875 = vcombine.high %v873, %v873
    %v876 = vcombine.high %v856, %v856
    %v878 = vunpack.c.l.s4 1983009808
    %v879 = vunpack.c.0.s8 %v878
    %v880 = vlaneseq
    %v881 = vshrl.u32 %v880, 7
    %v882 = vsub.s32 %v879, %v881
    %v883 = vrot.slane %v856, %v882
    %v885 = vunpack.c.l.s4 1983009808
    %v886 = vunpack.c.0.s8 %v885
    %v887 = vlaneseq
    %v888 = vshrl.u32 %v887, 7
    %v889 = vsub.s32 %v886, %v888
    %v890 = vrot.slane %v876, %v889
    %v891 = vcombine.high %v883, %v883
    %v892 = vcombine.high %v890, %v890
    %v901 = vsub.f32 %v638, %v866
    %v902 = vsub.f32 %v640, %v874
    %v903 = vsub.f32 %v709, %v873
    %v904 = vsub.f32 %v711, %v875
    %v905 = vsub.f32 %v780, %v883
    %v906 = vsub.f32 %v782, %v891
    %v907 = vsub.f32 %v851, %v890
    %v908 = vsub.f32 %v853, %v892
    %v909 = vmul.f32 %v901, %v901
    %v910 = vmul.f32 %v902, %v902
    %v911 = vmul.f32 %v903, %v903
    %v912 = vmul.f32 %v904, %v904
    %v913 = vmul.f32 %v905, %v905
    %v914 = vmul.f32 %v906, %v906
    %v915 = vmul.f32 %v907, %v907
    %v916 = vmul.f32 %v908, %v908
    %vm917 = vcmask 1041408
    %v918 = vsel %vm917, %v909, 0.0
    %v919 = vsel %vm917, %v910, 0.0
    %v920 = vadd.f32 %v918, %v919
    %v921 = vsel %vm917, %v911, 0.0
    %v922 = vadd.f32 %v920, %v921
    %v923 = vsel %vm917, %v912, 0.0
    %v924 = vadd.f32 %v922, %v923
    %v925 = vsel %vm917, %v913, 0.0
    %v926 = vadd.f32 %v924, %v925
    %v927 = vsel %vm917, %v914, 0.0
    %v928 = vadd.f32 %v926, %v927
    %v929 = vsel %vm917, %v915, 0.0
    %v930 = vadd.f32 %v928, %v929
    %v931 = vsel %vm917, %v916, 0.0
    %v932 = vadd.f32 %v930, %v931
    %933 = vadd.xlane.f32.xlu0 %v932
    %v934 = vpop.xlane.xlu0 %933
    %v935 = vrot.slane %v934, 4
    %v936 = vadd.f32 %v934, %v935
    %v937 = vrot.slane %v936, 2
    %v938 = vadd.f32 %v936, %v937
    %v939 = vrot.slane %v938, 1
    %v940 = vadd.f32 %v938, %v939
    %s941 = vtos %v940
    %s942 = smul.f32 %s941, 0.00048828125
    %s943 = scalar_lea.smem [#allocation15], 0
    %944 = sst [smem:[%s943]] %s942
    // Predicated region
    $region54: #{tpu_custom_call.1} parent=1 // pred_check
      _
    $region55: #{tpu_custom_call.1} parent=1 // pred_check_branch
      %946 = sbr.rel (0) target = $region57
    $region56: #{tpu_custom_call.1} parent=1 // pred_region
      %s948 = ssub.s32 16, 16
      %949 = vsyncadd [#allocation8], %s948
      %952 = dma.smem_to_hbm [#allocation15], 16, %s10, [#allocation8]
    $region57: #{tpu_custom_call.1} parent=1 // pred_fallthru
      _
    // Predicated region
    $region58: #{tpu_custom_call.1} parent=1 // pred_check
      _
    $region59: #{tpu_custom_call.1} parent=1 // pred_check_branch
      %954 = sbr.rel (0) target = $region61
    $region60: #{tpu_custom_call.1} parent=1 // pred_region
      %955 = dma.done [#allocation8], 16
    $region61: #{tpu_custom_call.1} parent=1 // pred_fallthru
      _
    %956 = sfence
    %957 = vsyncpa [#allocation7], 1
    %958 = vsyncpa [#allocation14], 1
    %959 = vsyncpa [#allocation8], 1
    %960 = vsyncpa [#allocation9], 1
    %961 = vsyncpa [#allocation11], 1

</llo_original>
